<compile_context>
chip_gen: v7x
topology: tpu7x:2x2x1
jax: 0.10.0
libtpu: 0.0.40
codegen_flags: <defaults>
</compile_context>

<pallas_src>
import jax
import jax.numpy as jnp
from jax.experimental import pallas as pl
from jax.experimental.pallas import tpu as pltpu

HIDDEN = 256        # fixed by the reference module (nn.LSTMCell(..., 256))
TEMPERATURE = 0.2   # gumbel_softmax temperature used in forward


# --------------------------------- the kernel --------------------------------
def generator_kernel(fcb_ref, noise_ref, out_ref):
    """One row-block of the flattened (B*T, V) output.

    logits = fc(hidden_states[-1]) = fc_b   (hidden state stays zero in the reference)
    out    = softmax(logits + log(Exp(1) noise), -1) / TEMPERATURE
    """
    z = fcb_ref[...] + jnp.log(noise_ref[...])          # (tn, V) logits + gumbel noise
    z = z - jnp.max(z, axis=-1, keepdims=True)
    e = jnp.exp(z)
    inv = jnp.float32(1.0 / TEMPERATURE) / jnp.sum(e, axis=-1, keepdims=True)
    out_ref[...] = e * inv


# ------------------------------ wrapper / params ------------------------------
def init_generator_params(key, vocab_size, embedding_dim, latent_dim):
    """Full parameter set of the PyTorch module (LSTM/embedding weights are kept
    for interface parity but are dead w.r.t. the forward output, see header)."""
    ks = jax.random.split(key, 11)
    kb = HIDDEN ** -0.5
    u = lambda k, shape: jax.random.uniform(k, shape, jnp.float32, -kb, kb)
    emb = jax.random.normal(ks[10], (vocab_size, embedding_dim), jnp.float32)
    emb = emb.at[0].set(0.0)  # padding_idx=0
    return dict(
        w_ih0=u(ks[0], (4 * HIDDEN, embedding_dim + latent_dim)),
        w_hh0=u(ks[1], (4 * HIDDEN, HIDDEN)),
        b_ih0=u(ks[2], (4 * HIDDEN,)),
        b_hh0=u(ks[3], (4 * HIDDEN,)),
        w_ih1=u(ks[4], (4 * HIDDEN, HIDDEN)),
        w_hh1=u(ks[5], (4 * HIDDEN, HIDDEN)),
        b_ih1=u(ks[6], (4 * HIDDEN,)),
        b_hh1=u(ks[7], (4 * HIDDEN,)),
        fc_w=u(ks[8], (vocab_size, HIDDEN)),
        fc_b=u(ks[9], (vocab_size,)),
        embedding=emb,
    )


def _row_tile(n):
    """Largest row tile <= 512 that divides n (multiple of 8 when possible)."""
    for t in (512, 256, 128, 64, 32, 16, 8):
        if n % t == 0:
            return t
    return n


def generator_forward(params, x, seed=0):
    """x: [B, msl, latent_dim] float32 -> [B, msl, vocab_size] float32.

    x only contributes its batch/sequence sizes: the reference's fc input is
    identically zero, so the returned tensor does not depend on x values.
    """
    B, T, _ = x.shape
    V = params["fc_b"].shape[0]
    N = B * T

    # torch.empty_like(logits).exponential_()  -> Exponential(1) noise per element
    noise = jax.random.exponential(jax.random.PRNGKey(seed), (N, V), dtype=jnp.float32)
    fcb = params["fc_b"].reshape(1, V).astype(jnp.float32)

    tn = _row_tile(N)
    grid_spec = pltpu.PrefetchScalarGridSpec(
        num_scalar_prefetch=0,
        grid=(N // tn,),
        in_specs=[
            pl.BlockSpec((1, V), lambda i: (0, 0)),    # fc bias (constant across grid)
            pl.BlockSpec((tn, V), lambda i: (i, 0)),   # exponential noise rows
        ],
        out_specs=pl.BlockSpec((tn, V), lambda i: (i, 0)),  # lane-dense V-last output
    )
    out_flat = pl.pallas_call(
        generator_kernel,
        grid_spec=grid_spec,
        out_shape=jax.ShapeDtypeStruct((N, V), jnp.float32),
        compiler_params=pltpu.CompilerParams(dimension_semantics=("parallel",)),
    )(fcb, noise)

    # Contiguous reshape only (no transpose / HBM round trip):
    # rows are ordered (b, t) exactly like torch.stack(outputs, dim=1).
    return out_flat.reshape(B, T, V)


if __name__ == "__main__":
    key = jax.random.PRNGKey(0)
    pkey, xkey = jax.random.split(key)

    vocab_size, embedding_dim, latent_dim, msl, batch = 128, 32, 32, 8, 8
    params = init_generator_params(pkey, vocab_size, embedding_dim, latent_dim)
    x = jax.random.normal(xkey, (batch, msl, latent_dim), jnp.float32)

    out = generator_forward(params, x, seed=0)
    out = jax.block_until_ready(out)

    assert out.shape == (batch, msl, vocab_size), out.shape
    assert bool(jnp.all(jnp.isfinite(out)))
    # gumbel_softmax divides the softmax by tau=0.2, so each row sums to ~5
    assert bool(jnp.allclose(jnp.sum(out, axis=-1), 1.0 / TEMPERATURE, atol=1e-3))
    print("KERNEL_OK")
</pallas_src>

<mosaic_0001>
module attributes {stable_mosaic.version = 11 : i64} {
  func.func @generator_kernel(%arg0: i32, %arg1: memref<1x128xf32, #tpu.memory_space<vmem>>, %arg2: memref<64x128xf32, #tpu.memory_space<vmem>>, %arg3: memref<64x128xf32, #tpu.memory_space<vmem>>) attributes {dimension_semantics = [#tpu.dimension_semantics<parallel>], iteration_bounds = array<i64: 1>, scalar_prefetch = 0 : i64, scratch_operands = 0 : i64, tpu.core_type = #tpu.core_type<tc>, window_params = [{pipeline_mode = #tpu.pipeline_mode<synchronous>, transform_indices = @transform_0, window_bounds = array<i64: 1, 128>}, {transform_indices = @transform_1, window_bounds = array<i64: 64, 128>}, {transform_indices = @transform_2, window_bounds = array<i64: 64, 128>}]} {
    %c0 = arith.constant 0 : index
    %c0_0 = arith.constant 0 : index
    %0 = vector.load %arg1[%c0, %c0_0] : memref<1x128xf32, #tpu.memory_space<vmem>>, vector<1x128xf32>
    %c0_1 = arith.constant 0 : index
    %c0_2 = arith.constant 0 : index
    %1 = vector.load %arg2[%c0_1, %c0_2] : memref<64x128xf32, #tpu.memory_space<vmem>>, vector<64x128xf32>
    %2 = math.log %1 : vector<64x128xf32>
    %3 = vector.broadcast %0 : vector<1x128xf32> to vector<64x128xf32>
    %4 = arith.addf %3, %2 : vector<64x128xf32>
    %cst = arith.constant dense<0xFF800000> : vector<64xf32>
    %5 = vector.multi_reduction <maximumf>, %4, %cst [1] : vector<64x128xf32> to vector<64xf32>
    %6 = vector.shape_cast %5 : vector<64xf32> to vector<64x1xf32>
    %7 = vector.broadcast %6 : vector<64x1xf32> to vector<64x128xf32>
    %8 = arith.subf %4, %7 : vector<64x128xf32>
    %9 = math.exp %8 : vector<64x128xf32>
    %cst_3 = arith.constant dense<0.000000e+00> : vector<64xf32>
    %10 = vector.multi_reduction <add>, %9, %cst_3 [1] : vector<64x128xf32> to vector<64xf32>
    %11 = vector.shape_cast %10 : vector<64xf32> to vector<64x1xf32>
    %cst_4 = arith.constant 5.000000e+00 : f32
    %12 = vector.broadcast %cst_4 : f32 to vector<64x1xf32>
    %13 = arith.divf %12, %11 : vector<64x1xf32>
    %14 = vector.broadcast %13 : vector<64x1xf32> to vector<64x128xf32>
    %15 = arith.mulf %9, %14 : vector<64x128xf32>
    %c0_5 = arith.constant 0 : index
    %c0_6 = arith.constant 0 : index
    %16 = vector.load %arg3[%c0_5, %c0_6] : memref<64x128xf32, #tpu.memory_space<vmem>>, vector<64x128xf32>
    tpu.vector_store %arg3[%c0_5, %c0_6], %15 {strides = array<i32>} : memref<64x128xf32, #tpu.memory_space<vmem>>, vector<64x128xf32>,
    return
  }
  func.func @transform_0(%arg0: i32) -> (i32, i32) {
    %c0_i32 = arith.constant 0 : i32
    %c0_i32_0 = arith.constant 0 : i32
    %c0_i32_1 = arith.constant 0 : i32
    return %c0_i32, %c0_i32_0 : i32, i32
  }
  func.func @transform_1(%arg0: i32) -> (i32, i32) {
    %c0_i32 = arith.constant 0 : i32
    %c0_i32_0 = arith.constant 0 : i32
    return %arg0, %c0_i32 : i32, i32
  }
  func.func @transform_2(%arg0: i32) -> (i32, i32) {
    %c0_i32 = arith.constant 0 : i32
    %c0_i32_0 = arith.constant 0 : i32
    return %arg0, %c0_i32 : i32, i32
  }
}

</mosaic_0001>

<llo_original>
// kernel: tpu_custom_call.1
$region0: #{tpu_custom_call.1}
  #allocation0 [shape = 'u32[]', space=smem, size = 0x4, offset = 0x4, fixed_abs, tag = 'smem constant byte address 0x4 - core index']
  #allocation1 [shape = 'u32[144,128]{1,0:T(1,128)}', space=vmem, size = 0x12000, scoped, tag = 'internal scratch']
  %s0 = inlined_call_operand.hbm [shape: f32[1,128], index: 0, kind: input, shape index: {}]
  %s1 = inlined_call_operand.hbm [shape: f32[64,128], index: 1, kind: input, shape index: {}]
  %s2 = inlined_call_operand.hbm [shape: f32[64,128], index: 2, kind: output, shape index: {}]
  %s3 = sld [smem:[#allocation0]]
  $region26: #{tpu_custom_call.1} parent=0
    _
  %s5 = ssub.s32 1, %s3
  %s6 = scalar_select 0, %s5, %s3
  $region1: #{tpu_custom_call.1} parent=0
    #allocation2 [shape = 'u8[512]{0}', space=vmem, size = 0x400, scoped, tag = 'input window, operand 0, single buffered']
    #allocation3 [shape = 's32[1]{0}', space=sflag, size = 0x4, scoped, tag = 'scoped memory for tpu_custom_call.1']
    #allocation4 [shape = 's32[1]{0}', space=sflag, size = 0x4, scoped, tag = 'scoped memory for tpu_custom_call.1']
    #allocation5 [shape = 'u8[32768]{0}', space=vmem, size = 0x8000, scoped, tag = 'input window, operand 1, single buffered']
    #allocation6 [shape = 's32[1]{0}', space=sflag, size = 0x4, scoped, tag = 'scoped memory for tpu_custom_call.1']
    #allocation7 [shape = 'u8[32768]{0}', space=vmem, size = 0x8000, scoped, tag = 'output window, operand 0, single buffered']
    %7 = vsyncpa [#allocation3], 0
    %8 = vsyncpa [#allocation6], 0
    %9 = vsyncpa [#allocation4], 0
    // Predicated region
    $region2: #{tpu_custom_call.1} parent=1 // pred_check
      _
    $region3: #{tpu_custom_call.1} parent=1 // pred_check_branch
      %11 = sbr.rel (0) target = $region5
    $region4: #{tpu_custom_call.1} parent=1 // pred_region
      %s13 = ssub.s32 16, 16
      %14 = vsyncadd [#allocation3], %s13
      %s16 = sshll.u32 [#allocation2], 4
      %s17 = int_to_ptr.vmem [resolvable:$true] %s16
      %19 = dma.hbm_to_vmem [thread:$0]  %s0, 16, %s17, [#allocation3]
    $region5: #{tpu_custom_call.1} parent=1 // pred_fallthru
      _
    // Predicated region
    $region6: #{tpu_custom_call.1} parent=1 // pred_check
      _
    $region7: #{tpu_custom_call.1} parent=1 // pred_check_branch
      %21 = sbr.rel (0) target = $region9
    $region8: #{tpu_custom_call.1} parent=1 // pred_region
      %s23 = ssub.s32 1024, 1024
      %24 = vsyncadd [#allocation6], %s23
      %s25 = sshll.u32 [#allocation5], 4
      %s26 = int_to_ptr.vmem [resolvable:$true] %s25
      %31 = dma.hbm_to_vmem [thread:$0]  %s1, 1024, %s26, [#allocation6], 128, 128, 8
    $region9: #{tpu_custom_call.1} parent=1 // pred_fallthru
      _
    // Predicated region
    $region10: #{tpu_custom_call.1} parent=1 // pred_check
      _
    $region11: #{tpu_custom_call.1} parent=1 // pred_check_branch
      %33 = sbr.rel (0) target = $region13
    $region12: #{tpu_custom_call.1} parent=1 // pred_region
      %34 = dma.done [#allocation3], 16
    $region13: #{tpu_custom_call.1} parent=1 // pred_fallthru
      _
    // Predicated region
    $region14: #{tpu_custom_call.1} parent=1 // pred_check
      _
    $region15: #{tpu_custom_call.1} parent=1 // pred_check_branch
      %36 = sbr.rel (0) target = $region17
    $region16: #{tpu_custom_call.1} parent=1 // pred_region
      %37 = dma.done [#allocation6], 1024
    $region17: #{tpu_custom_call.1} parent=1 // pred_fallthru
      _
    %v38 = vld [vmem:[#allocation2] sm:$0x1]
    %v39 = vld [vmem:[#allocation5] sm:$0xff]
    %v40 = vld [vmem:[#allocation5 + $0x8] sm:$0xff]
    %v41 = vld [vmem:[#allocation5 + $0x10] sm:$0xff]
    %v42 = vld [vmem:[#allocation5 + $0x18] sm:$0xff]
    %v43 = vld [vmem:[#allocation5 + $0x20] sm:$0xff]
    %v44 = vld [vmem:[#allocation5 + $0x28] sm:$0xff]
    %v45 = vld [vmem:[#allocation5 + $0x30] sm:$0xff]
    %v46 = vld [vmem:[#allocation5 + $0x38] sm:$0xff]
    %v47 = vlog2.pop %v39
    %v48 = vmul.f32 %v47, 0.6931472
    %v49 = vlog2.pop %v40
    %v50 = vmul.f32 %v49, 0.6931472
    %v51 = vlog2.pop %v41
    %v52 = vmul.f32 %v51, 0.6931472
    %v53 = vlog2.pop %v42
    %v54 = vmul.f32 %v53, 0.6931472
    %v55 = vlog2.pop %v43
    %v56 = vmul.f32 %v55, 0.6931472
    %v57 = vlog2.pop %v44
    %v58 = vmul.f32 %v57, 0.6931472
    %v59 = vlog2.pop %v45
    %v60 = vmul.f32 %v59, 0.6931472
    %v61 = vlog2.pop %v46
    %v62 = vmul.f32 %v61, 0.6931472
    %v64 = vlaneseq
    %v65 = vshrl.u32 %v64, 7
    %v66 = vsub.s32 0, %v65
    %v67 = vrot.slane %v38, %v66
    %v69 = vadd.f32 %v67, %v48
    %v70 = vadd.f32 %v67, %v50
    %v71 = vadd.f32 %v67, %v52
    %v72 = vadd.f32 %v67, %v54
    %v73 = vadd.f32 %v67, %v56
    %v74 = vadd.f32 %v67, %v58
    %v75 = vadd.f32 %v67, %v60
    %v76 = vadd.f32 %v67, %v62
    %77 = vmax.xlane.f32.xlu0 %v69
    %v78 = vpop.xlane.xlu0 %77
    %79 = vmax.xlane.f32.xlu0 %v70
    %v80 = vpop.xlane.xlu0 %79
    %81 = vmax.xlane.f32.xlu0 %v71
    %v82 = vpop.xlane.xlu0 %81
    %83 = vmax.xlane.f32.xlu0 %v72
    %v84 = vpop.xlane.xlu0 %83
    %85 = vmax.xlane.f32.xlu0 %v73
    %v86 = vpop.xlane.xlu0 %85
    %87 = vmax.xlane.f32.xlu0 %v74
    %v88 = vpop.xlane.xlu0 %87
    %89 = vmax.xlane.f32.xlu0 %v75
    %v90 = vpop.xlane.xlu0 %89
    %91 = vmax.xlane.f32.xlu0 %v76
    %v92 = vpop.xlane.xlu0 %91
    %v93 = vsub.f32 %v69, %v78
    %v94 = vsub.f32 %v70, %v80
    %v95 = vsub.f32 %v71, %v82
    %v96 = vsub.f32 %v72, %v84
    %v97 = vsub.f32 %v73, %v86
    %v98 = vsub.f32 %v74, %v88
    %v99 = vsub.f32 %v75, %v90
    %v100 = vsub.f32 %v76, %v92
    %v101 = vmul.f32 %v93, 1.442695
    %v102 = vpow.pop %v101
    %v103 = vmul.f32 %v94, 1.442695
    %v104 = vpow.pop %v103
    %v105 = vmul.f32 %v95, 1.442695
    %v106 = vpow.pop %v105
    %v107 = vmul.f32 %v96, 1.442695
    %v108 = vpow.pop %v107
    %v109 = vmul.f32 %v97, 1.442695
    %v110 = vpow.pop %v109
    %v111 = vmul.f32 %v98, 1.442695
    %v112 = vpow.pop %v111
    %v113 = vmul.f32 %v99, 1.442695
    %v114 = vpow.pop %v113
    %v115 = vmul.f32 %v100, 1.442695
    %v116 = vpow.pop %v115
    %117 = vadd.xlane.f32.xlu0 %v102
    %v118 = vpop.xlane.xlu0 %117
    %119 = vadd.xlane.f32.xlu0 %v104
    %v120 = vpop.xlane.xlu0 %119
    %121 = vadd.xlane.f32.xlu0 %v106
    %v122 = vpop.xlane.xlu0 %121
    %123 = vadd.xlane.f32.xlu0 %v108
    %v124 = vpop.xlane.xlu0 %123
    %125 = vadd.xlane.f32.xlu0 %v110
    %v126 = vpop.xlane.xlu0 %125
    %127 = vadd.xlane.f32.xlu0 %v112
    %v128 = vpop.xlane.xlu0 %127
    %129 = vadd.xlane.f32.xlu0 %v114
    %v130 = vpop.xlane.xlu0 %129
    %131 = vadd.xlane.f32.xlu0 %v116
    %v132 = vpop.xlane.xlu0 %131
    %v133 = vrcp.pop %v118
    %v134 = vmul.f32 5.0, %v133
    %v135 = vrcp.pop %v120
    %v136 = vmul.f32 5.0, %v135
    %v137 = vrcp.pop %v122
    %v138 = vmul.f32 5.0, %v137
    %v139 = vrcp.pop %v124
    %v140 = vmul.f32 5.0, %v139
    %v141 = vrcp.pop %v126
    %v142 = vmul.f32 5.0, %v141
    %v143 = vrcp.pop %v128
    %v144 = vmul.f32 5.0, %v143
    %v145 = vrcp.pop %v130
    %v146 = vmul.f32 5.0, %v145
    %v147 = vrcp.pop %v132
    %v148 = vmul.f32 5.0, %v147
    %v149 = vmul.f32 %v102, %v134
    %v150 = vmul.f32 %v104, %v136
    %v151 = vmul.f32 %v106, %v138
    %v152 = vmul.f32 %v108, %v140
    %v153 = vmul.f32 %v110, %v142
    %v154 = vmul.f32 %v112, %v144
    %v155 = vmul.f32 %v114, %v146
    %v156 = vmul.f32 %v116, %v148
    %157 = vst [vmem:[#allocation7] sm:$0xff] %v149
    %158 = vst [vmem:[#allocation7 + $0x8] sm:$0xff] %v150
    %159 = vst [vmem:[#allocation7 + $0x10] sm:$0xff] %v151
    %160 = vst [vmem:[#allocation7 + $0x18] sm:$0xff] %v152
    %161 = vst [vmem:[#allocation7 + $0x20] sm:$0xff] %v153
    %162 = vst [vmem:[#allocation7 + $0x28] sm:$0xff] %v154
    %163 = vst [vmem:[#allocation7 + $0x30] sm:$0xff] %v155
    %164 = vst [vmem:[#allocation7 + $0x38] sm:$0xff] %v156
    // Predicated region
    $region18: #{tpu_custom_call.1} parent=1 // pred_check
      _
    $region19: #{tpu_custom_call.1} parent=1 // pred_check_branch
      %166 = sbr.rel (0) target = $region21
    $region20: #{tpu_custom_call.1} parent=1 // pred_region
      %s168 = ssub.s32 1024, 1024
      %169 = vsyncadd [#allocation4], %s168
      %s170 = sshll.u32 [#allocation7], 4
      %s171 = int_to_ptr.vmem [resolvable:$true] %s170
      %176 = dma.vmem_to_hbm [thread:$0]  %s171, 1024, %s2, [#allocation4], 128, 128, 8
    $region21: #{tpu_custom_call.1} parent=1 // pred_fallthru
      _
    // Predicated region
    $region22: #{tpu_custom_call.1} parent=1 // pred_check
      _
    $region23: #{tpu_custom_call.1} parent=1 // pred_check_branch
      %178 = sbr.rel (0) target = $region25
    $region24: #{tpu_custom_call.1} parent=1 // pred_region
      %179 = dma.done [#allocation4], 1024
    $region25: #{tpu_custom_call.1} parent=1 // pred_fallthru
      _
    %180 = vsyncpa [#allocation3], 1
    %181 = vsyncpa [#allocation6], 1
    %182 = vsyncpa [#allocation4], 1

</llo_original>
